<compile_context>
chip_gen: v7x
topology: tpu7x:2x2x1
jax: 0.10.0
libtpu: 0.0.40
codegen_flags: <defaults>
</compile_context>

<pallas_src>
import functools

import numpy as np
import jax
import jax.numpy as jnp
from jax.experimental import pallas as pl
from jax.experimental.pallas import tpu as pltpu

_LANES = 128
_MAX_TILE_ROWS = 1024   # (1024, 128) f32 block = 512 KiB


def _mae_sums_kernel(pred_ref, gt_ref, val_ref, loss_ref, aux_ref, *,
                     count_nonzero):
    # One grid step: reduce a (tile_rows, 128) lane-dense slab to a (1, 128)
    # row of per-lane partial sums. The cross-lane reduction is deferred to the
    # wrapper (one tiny jnp.sum over (n_blocks, 128)).
    p = pred_ref[...].astype(jnp.float32)
    g = gt_ref[...].astype(jnp.float32)
    w = val_ref[...].astype(jnp.float32)

    wdiff = jnp.abs(g - p) * w
    loss_ref[...] = jnp.sum(wdiff, axis=0, keepdims=True)

    if count_nonzero:
        aux = (w != 0.0).astype(jnp.float32)   # if_dimension=False path
    else:
        aux = w                                 # if_dimension=True path
    aux_ref[...] = jnp.sum(aux, axis=0, keepdims=True)


def _partial_sums(pred2, gt2, val2, tile_rows, count_nonzero):
    rows, lanes = pred2.shape
    n_blocks = rows // tile_rows

    blk = pl.BlockSpec((tile_rows, lanes), lambda i: (i, 0))
    out_spec = pl.BlockSpec((1, lanes), lambda i: (i, 0))

    loss_p, aux_p = pl.pallas_call(
        functools.partial(_mae_sums_kernel, count_nonzero=count_nonzero),
        out_shape=(
            jax.ShapeDtypeStruct((n_blocks, lanes), jnp.float32),
            jax.ShapeDtypeStruct((n_blocks, lanes), jnp.float32),
        ),
        grid_spec=pltpu.PrefetchScalarGridSpec(
            num_scalar_prefetch=0,
            grid=(n_blocks,),
            in_specs=[blk, blk, blk],
            out_specs=[out_spec, out_spec],
        ),
        compiler_params=pltpu.CompilerParams(
            dimension_semantics=("parallel",)),
    )(pred2, gt2, val2)

    return jnp.sum(loss_p), jnp.sum(aux_p)


def keypoints_mae_loss(keypoints_pred, keypoints_gt, keypoints_binary_validity,
                       if_dimension=True, max_tile_rows=_MAX_TILE_ROWS):
    """JAX/Pallas equivalent of KeypointsMAELoss.forward."""
    D = keypoints_pred.shape[-1]
    dtype = keypoints_pred.dtype

    # Broadcast validity over the coordinate axis (PyTorch broadcasting of
    # (B, J, 1) against (B, J, D)), then flatten to a lane-dense slab.
    val_b = jnp.broadcast_to(
        keypoints_binary_validity.astype(dtype), keypoints_pred.shape)
    pred_flat = keypoints_pred.reshape(-1)
    gt_flat = keypoints_gt.astype(dtype).reshape(-1)
    val_flat = val_b.reshape(-1)

    # ---- Tiling: lane-dense rows, even block split, minimal padding. ----
    total = pred_flat.shape[0]                      # N * D elements
    rows = -(-total // _LANES)                      # 128-lane rows needed
    rows8 = -(-rows // 8) * 8                       # sublane multiple
    max_tile_rows = max(8, (int(max_tile_rows) // 8) * 8)
    n_blocks = -(-rows8 // max_tile_rows)           # blocks needed at max tile
    tile_rows = -(-(-(-rows8 // n_blocks)) // 8) * 8  # ceil(rows8/n_blocks) -> x8
    rows_padded = n_blocks * tile_rows
    padded_total = rows_padded * _LANES

    pad = padded_total - total
    if pad:
        # Padded validity is 0, so padding contributes nothing to any sum
        # (neither to the weighted |diff| sum nor to the nonzero count).
        pred_flat = jnp.pad(pred_flat, (0, pad))
        gt_flat = jnp.pad(gt_flat, (0, pad))
        val_flat = jnp.pad(val_flat, (0, pad))

    pred2 = pred_flat.reshape(rows_padded, _LANES)
    gt2 = gt_flat.reshape(rows_padded, _LANES)
    val2 = val_flat.reshape(rows_padded, _LANES)

    loss_sum, aux_sum = _partial_sums(
        pred2, gt2, val2, tile_rows, count_nonzero=not if_dimension)

    if if_dimension:
        # aux_sum counted the D-broadcast validity -> divide by D for true sum.
        vsum = aux_sum / D
        return loss_sum / (D * jnp.maximum(jnp.float32(1.0), vsum))
    else:
        # aux_sum counted nonzeros of the D-broadcast validity -> divide by D.
        nnz = aux_sum / D
        return loss_sum / nnz


def _reference(pred, gt, val, if_dimension=True):
    loss = jnp.sum(jnp.abs(gt - pred) * val)
    if if_dimension:
        D = pred.shape[-1]
        return loss / (D * jnp.maximum(jnp.float32(1.0), jnp.sum(val)))
    else:
        return loss / jnp.sum((val != 0).astype(jnp.float32))


if __name__ == "__main__":
    key = jax.random.PRNGKey(0)
    k1, k2, k3, k4, k5, k6 = jax.random.split(key, 6)

    # Small shapes consistent with the module: (batch, joints, coord_dim).
    B, J, D = 2, 16, 3
    pred = jax.random.normal(k1, (B, J, D), dtype=jnp.float32)
    gt = jax.random.normal(k2, (B, J, D), dtype=jnp.float32)
    val = (jax.random.uniform(k3, (B, J, 1)) > 0.3).astype(jnp.float32)

    out = jax.block_until_ready(
        keypoints_mae_loss(pred, gt, val, if_dimension=True))
    ref = _reference(pred, gt, val, if_dimension=True)
    assert np.allclose(np.asarray(out), np.asarray(ref),
                       rtol=1e-5, atol=1e-6), (out, ref)

    # if_dimension=False branch (specialized kernel variant).
    out2 = jax.block_until_ready(
        keypoints_mae_loss(pred, gt, val, if_dimension=False))
    ref2 = _reference(pred, gt, val, if_dimension=False)
    assert np.allclose(np.asarray(out2), np.asarray(ref2),
                       rtol=1e-5, atol=1e-6), (out2, ref2)

    # Exercise the multi-block ("parallel" grid) path with a medium shape and
    # a deliberately small tile.
    B2, J2, D2 = 4, 200, 3
    pred_m = jax.random.normal(k4, (B2, J2, D2), dtype=jnp.float32)
    gt_m = jax.random.normal(k5, (B2, J2, D2), dtype=jnp.float32)
    val_m = (jax.random.uniform(k6, (B2, J2, 1)) > 0.3).astype(jnp.float32)

    out3 = jax.block_until_ready(
        keypoints_mae_loss(pred_m, gt_m, val_m, if_dimension=True,
                           max_tile_rows=8))
    ref3 = _reference(pred_m, gt_m, val_m, if_dimension=True)
    assert np.allclose(np.asarray(out3), np.asarray(ref3),
                       rtol=1e-5, atol=1e-6), (out3, ref3)

    print("KERNEL_OK")
</pallas_src>

<mosaic_0001>
module attributes {stable_mosaic.version = 11 : i64} {
  func.func @_mae_sums_kernel(%arg0: i32, %arg1: memref<8x128xf32, #tpu.memory_space<vmem>>, %arg2: memref<8x128xf32, #tpu.memory_space<vmem>>, %arg3: memref<8x128xf32, #tpu.memory_space<vmem>>, %arg4: memref<1x128xf32, #tpu.memory_space<vmem>>, %arg5: memref<1x128xf32, #tpu.memory_space<vmem>>) attributes {dimension_semantics = [#tpu.dimension_semantics<parallel>], iteration_bounds = array<i64: 1>, scalar_prefetch = 0 : i64, scratch_operands = 0 : i64, tpu.core_type = #tpu.core_type<tc>, window_params = [{transform_indices = @transform_0, window_bounds = array<i64: 8, 128>}, {transform_indices = @transform_1, window_bounds = array<i64: 8, 128>}, {transform_indices = @transform_2, window_bounds = array<i64: 8, 128>}, {transform_indices = @transform_3, window_bounds = array<i64: 1, 128>}, {transform_indices = @transform_4, window_bounds = array<i64: 1, 128>}]} {
    %c0 = arith.constant 0 : index
    %c0_0 = arith.constant 0 : index
    %0 = vector.load %arg1[%c0, %c0_0] : memref<8x128xf32, #tpu.memory_space<vmem>>, vector<8x128xf32>
    %c0_1 = arith.constant 0 : index
    %c0_2 = arith.constant 0 : index
    %1 = vector.load %arg2[%c0_1, %c0_2] : memref<8x128xf32, #tpu.memory_space<vmem>>, vector<8x128xf32>
    %c0_3 = arith.constant 0 : index
    %c0_4 = arith.constant 0 : index
    %2 = vector.load %arg3[%c0_3, %c0_4] : memref<8x128xf32, #tpu.memory_space<vmem>>, vector<8x128xf32>
    %3 = arith.subf %1, %0 : vector<8x128xf32>
    %4 = math.absf %3 : vector<8x128xf32>
    %5 = arith.mulf %4, %2 : vector<8x128xf32>
    %cst = arith.constant dense<0.000000e+00> : vector<128xf32>
    %6 = vector.multi_reduction <add>, %5, %cst [0] : vector<8x128xf32> to vector<128xf32>
    %7 = vector.shape_cast %6 : vector<128xf32> to vector<1x128xf32>
    %c0_5 = arith.constant 0 : index
    %c0_6 = arith.constant 0 : index
    %8 = vector.load %arg4[%c0_5, %c0_6] : memref<1x128xf32, #tpu.memory_space<vmem>>, vector<1x128xf32>
    tpu.vector_store %arg4[%c0_5, %c0_6], %7 {strides = array<i32>} : memref<1x128xf32, #tpu.memory_space<vmem>>, vector<1x128xf32>,
    %cst_7 = arith.constant dense<0.000000e+00> : vector<128xf32>
    %9 = vector.multi_reduction <add>, %2, %cst_7 [0] : vector<8x128xf32> to vector<128xf32>
    %10 = vector.shape_cast %9 : vector<128xf32> to vector<1x128xf32>
    %c0_8 = arith.constant 0 : index
    %c0_9 = arith.constant 0 : index
    %11 = vector.load %arg5[%c0_8, %c0_9] : memref<1x128xf32, #tpu.memory_space<vmem>>, vector<1x128xf32>
    tpu.vector_store %arg5[%c0_8, %c0_9], %10 {strides = array<i32>} : memref<1x128xf32, #tpu.memory_space<vmem>>, vector<1x128xf32>,
    return
  }
  func.func @transform_0(%arg0: i32) -> (i32, i32) {
    %c0_i32 = arith.constant 0 : i32
    %c0_i32_0 = arith.constant 0 : i32
    return %arg0, %c0_i32 : i32, i32
  }
  func.func @transform_1(%arg0: i32) -> (i32, i32) {
    %c0_i32 = arith.constant 0 : i32
    %c0_i32_0 = arith.constant 0 : i32
    return %arg0, %c0_i32 : i32, i32
  }
  func.func @transform_2(%arg0: i32) -> (i32, i32) {
    %c0_i32 = arith.constant 0 : i32
    %c0_i32_0 = arith.constant 0 : i32
    return %arg0, %c0_i32 : i32, i32
  }
  func.func @transform_3(%arg0: i32) -> (i32, i32) {
    %c0_i32 = arith.constant 0 : i32
    %c0_i32_0 = arith.constant 0 : i32
    return %arg0, %c0_i32 : i32, i32
  }
  func.func @transform_4(%arg0: i32) -> (i32, i32) {
    %c0_i32 = arith.constant 0 : i32
    %c0_i32_0 = arith.constant 0 : i32
    return %arg0, %c0_i32 : i32, i32
  }
}

</mosaic_0001>

<llo_original>
// kernel: tpu_custom_call.1
$region0: #{tpu_custom_call.1}
  #allocation0 [shape = 'u32[]', space=smem, size = 0x4, offset = 0x4, fixed_abs, tag = 'smem constant byte address 0x4 - core index']
  #allocation1 [shape = 'u32[144,128]{1,0:T(1,128)}', space=vmem, size = 0x12000, scoped, tag = 'internal scratch']
  %s0 = inlined_call_operand.hbm [shape: f32[8,128], index: 0, kind: input, shape index: {}]
  %s1 = inlined_call_operand.hbm [shape: f32[8,128], index: 1, kind: input, shape index: {}]
  %s2 = inlined_call_operand.hbm [shape: f32[8,128], index: 2, kind: input, shape index: {}]
  %s3 = inlined_call_operand.hbm [shape: f32[1,128], index: 3, kind: output, shape index: {0}]
  %s4 = inlined_call_operand.hbm [shape: f32[1,128], index: 4, kind: output, shape index: {1}]
  %5 = xla_tuple %s3, %s4
  %s6 = sld [smem:[#allocation0]]
  $region42: #{tpu_custom_call.1} parent=0
    _
  %s8 = ssub.s32 1, %s6
  %s9 = scalar_select 0, %s8, %s6
  $region1: #{tpu_custom_call.1} parent=0
    #allocation2 [shape = 'u8[4096]{0}', space=vmem, size = 0x1000, scoped, tag = 'input window, operand 0, single buffered']
    #allocation3 [shape = 's32[1]{0}', space=sflag, size = 0x4, scoped, tag = 'scoped memory for tpu_custom_call.1']
    #allocation4 [shape = 's32[1]{0}', space=sflag, size = 0x4, scoped, tag = 'scoped memory for tpu_custom_call.1']
    #allocation5 [shape = 'u8[4096]{0}', space=vmem, size = 0x1000, scoped, tag = 'input window, operand 1, single buffered']
    #allocation6 [shape = 's32[1]{0}', space=sflag, size = 0x4, scoped, tag = 'scoped memory for tpu_custom_call.1']
    #allocation7 [shape = 'u8[4096]{0}', space=vmem, size = 0x1000, scoped, tag = 'input window, operand 2, single buffered']
    #allocation8 [shape = 'u8[512]{0}', space=vmem, size = 0x400, scoped, tag = 'output window, operand 0, single buffered']
    #allocation9 [shape = 'u8[512]{0}', space=vmem, size = 0x400, scoped, tag = 'output window, operand 1, single buffered']
    #allocation10 [shape = 's32[1]{0}', space=sflag, size = 0x4, scoped, tag = 'scoped memory for tpu_custom_call.1']
    %10 = vsyncpa [#allocation3], 0
    %11 = vsyncpa [#allocation6], 0
    %12 = vsyncpa [#allocation4], 0
    %13 = vsyncpa [#allocation10], 0
    // Predicated region
    $region2: #{tpu_custom_call.1} parent=1 // pred_check
      _
    $region3: #{tpu_custom_call.1} parent=1 // pred_check_branch
      %15 = sbr.rel (0) target = $region5
    $region4: #{tpu_custom_call.1} parent=1 // pred_region
      %s17 = ssub.s32 128, 128
      %18 = vsyncadd [#allocation3], %s17
      %s20 = sshll.u32 [#allocation2], 4
      %s21 = int_to_ptr.vmem [resolvable:$true] %s20
      %23 = dma.hbm_to_vmem [thread:$0]  %s0, 128, %s21, [#allocation3]
    $region5: #{tpu_custom_call.1} parent=1 // pred_fallthru
      _
    // Predicated region
    $region6: #{tpu_custom_call.1} parent=1 // pred_check
      _
    $region7: #{tpu_custom_call.1} parent=1 // pred_check_branch
      %25 = sbr.rel (0) target = $region9
    $region8: #{tpu_custom_call.1} parent=1 // pred_region
      %s27 = ssub.s32 128, 128
      %28 = vsyncadd [#allocation6], %s27
      %s30 = sshll.u32 [#allocation5], 4
      %s31 = int_to_ptr.vmem [resolvable:$true] %s30
      %33 = dma.hbm_to_vmem [thread:$0]  %s1, 128, %s31, [#allocation6]
    $region9: #{tpu_custom_call.1} parent=1 // pred_fallthru
      _
    // Predicated region
    $region10: #{tpu_custom_call.1} parent=1 // pred_check
      _
    $region11: #{tpu_custom_call.1} parent=1 // pred_check_branch
      %35 = sbr.rel (0) target = $region13
    $region12: #{tpu_custom_call.1} parent=1 // pred_region
      %s37 = ssub.s32 128, 128
      %38 = vsyncadd [#allocation6], %s37
      %s40 = sshll.u32 [#allocation7], 4
      %s41 = int_to_ptr.vmem [resolvable:$true] %s40
      %43 = dma.hbm_to_vmem [thread:$0]  %s2, 128, %s41, [#allocation6]
    $region13: #{tpu_custom_call.1} parent=1 // pred_fallthru
      _
    // Predicated region
    $region14: #{tpu_custom_call.1} parent=1 // pred_check
      _
    $region15: #{tpu_custom_call.1} parent=1 // pred_check_branch
      %45 = sbr.rel (0) target = $region17
    $region16: #{tpu_custom_call.1} parent=1 // pred_region
      %46 = dma.done [#allocation3], 128
    $region17: #{tpu_custom_call.1} parent=1 // pred_fallthru
      _
    // Predicated region
    $region18: #{tpu_custom_call.1} parent=1 // pred_check
      _
    $region19: #{tpu_custom_call.1} parent=1 // pred_check_branch
      %48 = sbr.rel (0) target = $region21
    $region20: #{tpu_custom_call.1} parent=1 // pred_region
      %49 = dma.done [#allocation6], 128
    $region21: #{tpu_custom_call.1} parent=1 // pred_fallthru
      _
    // Predicated region
    $region22: #{tpu_custom_call.1} parent=1 // pred_check
      _
    $region23: #{tpu_custom_call.1} parent=1 // pred_check_branch
      %51 = sbr.rel (0) target = $region25
    $region24: #{tpu_custom_call.1} parent=1 // pred_region
      %52 = dma.done [#allocation6], 128
    $region25: #{tpu_custom_call.1} parent=1 // pred_fallthru
      _
    %v53 = vld [vmem:[#allocation2] sm:$0xff]
    %v54 = vld [vmem:[#allocation5] sm:$0xff]
    %v55 = vld [vmem:[#allocation7] sm:$0xff]
    %v56 = vsub.f32 %v54, %v53
    %v57 = vand.u32 2147483647, %v56
    %v58 = vmul.f32 %v57, %v55
    %v59 = vrot.slane %v58, 4
    %v60 = vadd.f32 %v58, %v59
    %v61 = vrot.slane %v60, 2
    %v62 = vadd.f32 %v60, %v61
    %v63 = vrot.slane %v62, 1
    %v64 = vadd.f32 %v62, %v63
    %65 = vst [vmem:[#allocation8] sm:$0x1] %v64
    %v66 = vrot.slane %v55, 4
    %v67 = vadd.f32 %v55, %v66
    %v68 = vrot.slane %v67, 2
    %v69 = vadd.f32 %v67, %v68
    %v70 = vrot.slane %v69, 1
    %v71 = vadd.f32 %v69, %v70
    %72 = vst [vmem:[#allocation9] sm:$0x1] %v71
    // Predicated region
    $region26: #{tpu_custom_call.1} parent=1 // pred_check
      _
    $region27: #{tpu_custom_call.1} parent=1 // pred_check_branch
      %74 = sbr.rel (0) target = $region29
    $region28: #{tpu_custom_call.1} parent=1 // pred_region
      %s76 = ssub.s32 16, 16
      %77 = vsyncadd [#allocation4], %s76
      %s79 = sshll.u32 [#allocation8], 4
      %s80 = int_to_ptr.vmem [resolvable:$true] %s79
      %82 = dma.vmem_to_hbm [thread:$0]  %s80, 16, %s3, [#allocation4]
    $region29: #{tpu_custom_call.1} parent=1 // pred_fallthru
      _
    // Predicated region
    $region30: #{tpu_custom_call.1} parent=1 // pred_check
      _
    $region31: #{tpu_custom_call.1} parent=1 // pred_check_branch
      %84 = sbr.rel (0) target = $region33
    $region32: #{tpu_custom_call.1} parent=1 // pred_region
      %s86 = ssub.s32 16, 16
      %87 = vsyncadd [#allocation10], %s86
      %s89 = sshll.u32 [#allocation9], 4
      %s90 = int_to_ptr.vmem [resolvable:$true] %s89
      %92 = dma.vmem_to_hbm [thread:$0]  %s90, 16, %s4, [#allocation10]
    $region33: #{tpu_custom_call.1} parent=1 // pred_fallthru
      _
    // Predicated region
    $region34: #{tpu_custom_call.1} parent=1 // pred_check
      _
    $region35: #{tpu_custom_call.1} parent=1 // pred_check_branch
      %94 = sbr.rel (0) target = $region37
    $region36: #{tpu_custom_call.1} parent=1 // pred_region
      %95 = dma.done [#allocation4], 16
    $region37: #{tpu_custom_call.1} parent=1 // pred_fallthru
      _
    // Predicated region
    $region38: #{tpu_custom_call.1} parent=1 // pred_check
      _
    $region39: #{tpu_custom_call.1} parent=1 // pred_check_branch
      %97 = sbr.rel (0) target = $region41
    $region40: #{tpu_custom_call.1} parent=1 // pred_region
      %98 = dma.done [#allocation10], 16
    $region41: #{tpu_custom_call.1} parent=1 // pred_fallthru
      _
    %99 = vsyncpa [#allocation3], 1
    %100 = vsyncpa [#allocation6], 1
    %101 = vsyncpa [#allocation4], 1
    %102 = vsyncpa [#allocation10], 1

</llo_original>
